<compile_context>
chip_gen: v7x
topology: tpu7x:2x2x1
jax: 0.10.0
libtpu: 0.0.40
codegen_flags: <defaults>
</compile_context>

<pallas_src>
import functools

import jax
import jax.numpy as jnp
from jax import lax
from jax.experimental import pallas as pl
from jax.experimental.pallas import tpu as pltpu

ALPHA = 1.0   # rescaling factor for the positive terms
BETA = 0.5    # concentration parameter

_MIB = 1 << 20
_VMEM_TILE_BUDGET = 40 * _MIB   # target working set; leaves headroom below v7x's 64 MiB


def _round_up(x, m):
    return (x + m - 1) // m * m


def _vmem_estimate(tb, bp, d, itemsize):
    """Rough upper bound on the kernels' VMEM working set, in bytes."""
    y_resident = 2 * bp * d * itemsize      # resident keys (double-buffered by the pipeline)
    x_block = 2 * tb * d * itemsize         # streamed query row block (double-buffered)
    tiles = 7 * tb * bp * 4                 # f32 / i32 (TB, Bp) intermediates
    small = 2 * (6 * tb + 3 * bp) * 4       # per-row / per-column outputs, r input, scalars
    return y_resident + x_block + tiles + small


def _vmem_limit_bytes(tb, bp, d, itemsize):
    return int(max(32 * _MIB, _vmem_estimate(tb, bp, d, itemsize) + 16 * _MIB))


def _choose_tiles(b, d, itemsize):
    """Row-block size TB (multiple of 8, <= 256) and padded batch Bp, VMEM-bounded."""
    tb = min(_round_up(b, 8), 256)
    while True:
        bp = _round_up(b, tb)
        if _vmem_estimate(tb, bp, d, itemsize) <= _VMEM_TILE_BUDGET or tb <= 8:
            return tb, bp
        tb = max(8, _round_up(tb // 2, 8))


def _stats_kernel(invt_ref, x_ref, y_ref,
                  rowsum_ref, ebd_ref, simd_ref, coleb_ref, colews_ref,
                  *, block_rows, n_valid, beta, needs_mask):
    """Pass 1: every separable reduction of one (TB, Bp) score tile.

    Fused here: rowsum of exp(beta*sim) (for the v2t normalisers r[j]), the diagonal
    sim / eb terms, and the per-block column partials that the fully separable t2v
    direction needs (so t2v costs no extra launch / matmul / exp pass).
    """
    row0 = pl.program_id(0) * block_rows
    inv_temp = invt_ref[0, 0]

    # (TB, Bp) scores: contract the embedding dim (last axis of BOTH operands, so no
    # relayout), f32 accumulation on the MXU, operands fed in their native dtype.
    dots = lax.dot_general(x_ref[...], y_ref[...], (((1,), (1,)), ((), ())),
                           preferred_element_type=jnp.float32)
    sim = dots * inv_temp                                                   # (TB, Bp)

    col_ids = lax.broadcasted_iota(jnp.int32, sim.shape, 1)
    row_ids = lax.broadcasted_iota(jnp.int32, sim.shape, 0) + row0
    on_diag = col_ids == row_ids

    # Diagonal extracted from the very same MXU values as the row/column sums, so the
    # later (rowsum - diag) / (colsum - diag) subtractions are exactly consistent.
    sim_d = jnp.sum(jnp.where(on_diag, sim, 0.0), axis=1, keepdims=True)    # (TB, 1)
    eb_d = jnp.exp(sim_d * beta)                                            # == eb[i, i]

    eb = jnp.exp(sim * beta)                                                # (TB, Bp)
    if needs_mask:
        valid = (row_ids < n_valid) & (col_ids < n_valid)
        eb = jnp.where(valid, eb, 0.0)
    if beta == 0.5:
        # exp((1+beta)*sim) == eb**3: one exp pass over the tile + two VPU multiplies.
        ews = (eb * eb) * eb
    else:
        ews = jnp.exp(sim * (1.0 + beta))
        if needs_mask:
            ews = jnp.where(valid, ews, 0.0)

    rowsum_ref[...] = jnp.sum(eb, axis=1, keepdims=True)
    ebd_ref[...] = eb_d
    simd_ref[...] = sim_d
    coleb_ref[...] = jnp.sum(eb, axis=0, keepdims=True).reshape(1, 1, -1)
    colews_ref[...] = jnp.sum(jnp.where(on_diag, 0.0, ews),
                              axis=0, keepdims=True).reshape(1, 1, -1)


def _v2t_kernel(invt_ref, x_ref, y_ref, r_ref, out_ref,
                *, block_rows, n_valid, beta, needs_mask):
    """Pass 2: per-row sum_{j != i} exp((1+beta)*sim[i, j]) * r[j]."""
    row0 = pl.program_id(0) * block_rows
    dots = lax.dot_general(x_ref[...], y_ref[...], (((1,), (1,)), ((), ())),
                           preferred_element_type=jnp.float32)
    sim = dots * invt_ref[0, 0]
    wt = jnp.exp(sim * (1.0 + beta)) * r_ref[...]          # r (1, Bp) broadcasts over rows

    col_ids = lax.broadcasted_iota(jnp.int32, wt.shape, 1)
    row_ids = lax.broadcasted_iota(jnp.int32, wt.shape, 0) + row0
    keep = col_ids != row_ids                              # the module masks the diagonal
    if needs_mask:
        keep = keep & (col_ids < n_valid)
    out_ref[...] = jnp.sum(jnp.where(keep, wt, 0.0), axis=1, keepdims=True)


def _stats_pass(x, y, inv_temp, *, tb, bp, beta, needs_mask, b):
    d = x.shape[1]
    nblocks = bp // tb
    itemsize = jnp.dtype(x.dtype).itemsize
    kernel = functools.partial(_stats_kernel, block_rows=tb, n_valid=b,
                               beta=beta, needs_mask=needs_mask)
    row_vec = jax.ShapeDtypeStruct((bp, 1), jnp.float32)
    col_part = jax.ShapeDtypeStruct((nblocks, 1, bp), jnp.float32)
    cost = pl.CostEstimate(flops=2 * bp * bp * d + 6 * bp * bp,
                           transcendentals=bp * bp + 2 * bp,
                           bytes_accessed=2 * bp * d * itemsize + 40 * bp)
    return pl.pallas_call(
        kernel,
        out_shape=(row_vec, row_vec, row_vec, col_part, col_part),
        grid_spec=pltpu.PrefetchScalarGridSpec(
            num_scalar_prefetch=0,
            grid=(nblocks,),
            in_specs=[
                pl.BlockSpec(memory_space=pltpu.SMEM),          # 1/temp scalar (1, 1)
                pl.BlockSpec((tb, d), lambda i: (i, 0)),        # query row block (streamed)
                pl.BlockSpec((bp, d), lambda i: (0, 0)),        # keys, resident
            ],
            out_specs=[
                pl.BlockSpec((tb, 1), lambda i: (i, 0)),        # rowsum_eb
                pl.BlockSpec((tb, 1), lambda i: (i, 0)),        # eb diag
                pl.BlockSpec((tb, 1), lambda i: (i, 0)),        # sim diag
                pl.BlockSpec((1, 1, bp), lambda i: (i, 0, 0)),  # col partial of eb
                pl.BlockSpec((1, 1, bp), lambda i: (i, 0, 0)),  # col partial of ews (no diag)
            ],
        ),
        compiler_params=pltpu.CompilerParams(
            dimension_semantics=("parallel",),                  # TODO(synk): CORE_PARALLEL on v7x
            vmem_limit_bytes=_vmem_limit_bytes(tb, bp, d, itemsize)),
        cost_estimate=cost,
    )(inv_temp, x, y)


def _v2t_pass(x, y, r_row, inv_temp, *, tb, bp, beta, needs_mask, b):
    d = x.shape[1]
    nblocks = bp // tb
    itemsize = jnp.dtype(x.dtype).itemsize
    kernel = functools.partial(_v2t_kernel, block_rows=tb, n_valid=b,
                               beta=beta, needs_mask=needs_mask)
    cost = pl.CostEstimate(flops=2 * bp * bp * d + 4 * bp * bp,
                           transcendentals=bp * bp,
                           bytes_accessed=2 * bp * d * itemsize + 8 * bp)
    return pl.pallas_call(
        kernel,
        out_shape=jax.ShapeDtypeStruct((bp, 1), jnp.float32),
        grid_spec=pltpu.PrefetchScalarGridSpec(
            num_scalar_prefetch=0,
            grid=(nblocks,),
            in_specs=[
                pl.BlockSpec(memory_space=pltpu.SMEM),          # 1/temp scalar (1, 1)
                pl.BlockSpec((tb, d), lambda i: (i, 0)),        # query row block (streamed)
                pl.BlockSpec((bp, d), lambda i: (0, 0)),        # keys, resident
                pl.BlockSpec((1, bp), lambda i: (0, 0)),        # r[j] normalisers, resident
            ],
            out_specs=pl.BlockSpec((tb, 1), lambda i: (i, 0)),
        ),
        compiler_params=pltpu.CompilerParams(
            dimension_semantics=("parallel",),
            vmem_limit_bytes=_vmem_limit_bytes(tb, bp, d, itemsize)),
        cost_estimate=cost,
    )(inv_temp, x, y, r_row)


def hard_negative_nce_loss(composed_embs, target_embs, temp, alpha=ALPHA, beta=BETA):
    """Pallas TPU implementation of HardNegativeNCE.forward (broadcast-faithful)."""
    b, d = composed_embs.shape
    itemsize = jnp.dtype(composed_embs.dtype).itemsize
    tb, bp = _choose_tiles(b, d, itemsize)
    needs_mask = bp != b

    x, y = composed_embs, target_embs
    if needs_mask:
        pad = ((0, bp - b), (0, 0))
        x = jnp.pad(x, pad)
        y = jnp.pad(y, pad)

    inv_temp = jnp.reshape(1.0 / jnp.asarray(temp, dtype=jnp.float32), (1, 1))

    rowsum, eb_d, sim_d, col_eb_p, col_ews_p = _stats_pass(
        x, y, inv_temp, tb=tb, bp=bp, beta=beta, needs_mask=needs_mask, b=b)

    rowsum = rowsum[:b, 0]
    eb_d = eb_d[:b, 0]
    sim_d = sim_d[:b, 0]
    col_eb = jnp.sum(col_eb_p, axis=(0, 1))[:b]       # includes the diagonal, like the module
    col_ews = jnp.sum(col_ews_p, axis=(0, 1))[:b]     # diagonal masked, like the module

    # v2t normalisers.  NOTE the module's broadcasting: these index the *column* j.
    r = 1.0 / (rowsum - eb_d)                         # == 1 / (exp(b*sim).sum(1) - exp(diag))
    r_full = jnp.pad(r, (0, bp - b)) if needs_mask else r
    r_row = r_full[None, :]                           # (1, Bp), padded entries are 0

    s_off = _v2t_pass(x, y, r_row, inv_temp, tb=tb, bp=bp, beta=beta,
                      needs_mask=needs_mask, b=b)[:b, 0]

    es_d = jnp.exp(sim_d)                             # exp(sim[i, i])
    scale = float(b - 1)
    den_v2t = jnp.log(scale * s_off + alpha * es_d)
    den_t2v = jnp.log(scale * col_ews / (col_eb - eb_d) + alpha * es_d)
    return jnp.mean(den_v2t - sim_d) + jnp.mean(den_t2v - sim_d)


def _reference_loss(composed, target, temp, alpha=ALPHA, beta=BETA):
    """Pure-JAX transcription of the PyTorch module, preserving its broadcasting."""
    b = composed.shape[0]
    sim = jnp.matmul(composed, target.T,
                     precision=jax.lax.Precision.HIGHEST).astype(jnp.float32) / temp
    nom = jnp.diagonal(sim)
    beta_sim = beta * sim
    eb = jnp.exp(beta_sim)
    diag_eb = jnp.exp(jnp.diagonal(beta_sim))
    # NB: in the module these denominators are (B,) vectors dividing a (B, B) matrix,
    # which torch/numpy broadcasting aligns with the LAST (column) axis.
    w_v2t = (b - 1) * eb / (eb.sum(axis=1) - diag_eb)
    w_t2v = (b - 1) * eb / (eb.sum(axis=0) - diag_eb)
    eye = jnp.eye(b, dtype=bool)
    w_v2t = jnp.where(eye, alpha, w_v2t)
    w_t2v = jnp.where(eye, alpha, w_t2v)
    d_v2t = jnp.log((jnp.exp(sim) * w_v2t).sum(axis=1))
    d_t2v = jnp.log((jnp.exp(sim) * w_t2v).sum(axis=0))
    return (d_v2t - nom).mean() + (d_t2v - nom).mean()


if __name__ == "__main__":
    key = jax.random.PRNGKey(0)
    k1, k2, k3, k4 = jax.random.split(key, 4)
    temp = 0.07

    # Case 1: small batch that divides the tile exactly.
    B, D = 8, 128
    composed = jax.random.normal(k1, (B, D), dtype=jnp.float32)
    target = jax.random.normal(k2, (B, D), dtype=jnp.float32)
    # L2-normalise (standard for this contrastive loss) so exp(sim / temp) stays finite
    # in float32 for both the kernel and the reference at temp = 0.07.
    composed = composed / jnp.linalg.norm(composed, axis=-1, keepdims=True)
    target = target / jnp.linalg.norm(target, axis=-1, keepdims=True)

    loss = hard_negative_nce_loss(composed, target, temp)
    jax.block_until_ready(loss)
    ref = _reference_loss(composed, target, temp)
    assert jnp.isfinite(loss), loss
    assert jnp.allclose(loss, ref, rtol=1e-3, atol=1e-3), (loss, ref)

    # Case 2: batch not divisible by 8 (exercises the padded / masked tail path).
    B2, D2 = 13, 64
    composed2 = jax.random.normal(k3, (B2, D2), dtype=jnp.float32)
    target2 = jax.random.normal(k4, (B2, D2), dtype=jnp.float32)
    composed2 = composed2 / jnp.linalg.norm(composed2, axis=-1, keepdims=True)
    target2 = target2 / jnp.linalg.norm(target2, axis=-1, keepdims=True)

    loss2 = hard_negative_nce_loss(composed2, target2, temp)
    jax.block_until_ready(loss2)
    ref2 = _reference_loss(composed2, target2, temp)
    assert jnp.isfinite(loss2), loss2
    assert jnp.allclose(loss2, ref2, rtol=1e-3, atol=1e-3), (loss2, ref2)

    print("KERNEL_OK")
</pallas_src>

<mosaic_0001>
module attributes {stable_mosaic.version = 11 : i64} {
  func.func @_stats_kernel(%arg0: i32, %arg1: memref<1x1xf32, #tpu.memory_space<smem>>, %arg2: memref<8x128xf32, #tpu.memory_space<vmem>>, %arg3: memref<8x128xf32, #tpu.memory_space<vmem>>, %arg4: memref<8x1xf32, #tpu.memory_space<vmem>>, %arg5: memref<8x1xf32, #tpu.memory_space<vmem>>, %arg6: memref<8x1xf32, #tpu.memory_space<vmem>>, %arg7: memref<1x1x8xf32, #tpu.memory_space<vmem>>, %arg8: memref<1x1x8xf32, #tpu.memory_space<vmem>>) attributes {dimension_semantics = [#tpu.dimension_semantics<parallel>], iteration_bounds = array<i64: 1>, scalar_prefetch = 0 : i64, scratch_operands = 0 : i64, tpu.core_type = #tpu.core_type<tc>, window_params = [{transform_indices = @transform_0, window_bounds = array<i64: 1, 1>}, {transform_indices = @transform_1, window_bounds = array<i64: 8, 128>}, {pipeline_mode = #tpu.pipeline_mode<synchronous>, transform_indices = @transform_2, window_bounds = array<i64: 8, 128>}, {transform_indices = @transform_3, window_bounds = array<i64: 8, 1>}, {transform_indices = @transform_4, window_bounds = array<i64: 8, 1>}, {transform_indices = @transform_5, window_bounds = array<i64: 8, 1>}, {transform_indices = @transform_6, window_bounds = array<i64: 1, 1, 8>}, {transform_indices = @transform_7, window_bounds = array<i64: 1, 1, 8>}]} {
    %c8_i32 = arith.constant 8 : i32
    %0 = arith.muli %arg0, %c8_i32 : i32
    %c0 = arith.constant 0 : index
    %c0_0 = arith.constant 0 : index
    %1 = memref.load %arg1[%c0, %c0_0] : memref<1x1xf32, #tpu.memory_space<smem>>
    %c0_1 = arith.constant 0 : index
    %c0_2 = arith.constant 0 : index
    %2 = vector.load %arg2[%c0_1, %c0_2] : memref<8x128xf32, #tpu.memory_space<vmem>>, vector<8x128xf32>
    %c0_3 = arith.constant 0 : index
    %c0_4 = arith.constant 0 : index
    %3 = vector.load %arg3[%c0_3, %c0_4] : memref<8x128xf32, #tpu.memory_space<vmem>>, vector<8x128xf32>
    %cst = arith.constant dense<0.000000e+00> : vector<8x8xf32>
    %4 = tpu.matmul %2, %3, %cst {dimension_numbers = #tpu.dot_dimension_numbers<[1], [1], [0], [0], [0, 0, 1, 0], [], []>} : vector<8x128xf32>, vector<8x128xf32>, vector<8x8xf32> -> vector<8x8xf32>
    %5 = vector.broadcast %1 : f32 to vector<8x8xf32>
    %6 = arith.mulf %4, %5 : vector<8x8xf32>
    %7 = tpu.iota {dimensions = array<i32: 1>} : vector<8x8xi32>
    %8 = tpu.iota {dimensions = array<i32: 0>} : vector<8x8xi32>
    %9 = vector.broadcast %0 : i32 to vector<8x8xi32>
    %10 = arith.addi %8, %9 : vector<8x8xi32>
    %11 = arith.cmpi eq, %7, %10 : vector<8x8xi32>
    %cst_5 = arith.constant 0.000000e+00 : f32
    %12 = vector.broadcast %cst_5 : f32 to vector<8x8xf32>
    %13 = arith.select %11, %6, %12 : vector<8x8xi1>, vector<8x8xf32>
    %cst_6 = arith.constant dense<0.000000e+00> : vector<8xf32>
    %14 = vector.multi_reduction <add>, %13, %cst_6 [1] : vector<8x8xf32> to vector<8xf32>
    %15 = vector.shape_cast %14 : vector<8xf32> to vector<8x1xf32>
    %cst_7 = arith.constant 5.000000e-01 : f32
    %16 = vector.broadcast %cst_7 : f32 to vector<8x1xf32>
    %17 = arith.mulf %15, %16 : vector<8x1xf32>
    %18 = math.exp %17 : vector<8x1xf32>
    %cst_8 = arith.constant 5.000000e-01 : f32
    %19 = vector.broadcast %cst_8 : f32 to vector<8x8xf32>
    %20 = arith.mulf %6, %19 : vector<8x8xf32>
    %21 = math.exp %20 : vector<8x8xf32>
    %22 = arith.mulf %21, %21 : vector<8x8xf32>
    %23 = arith.mulf %22, %21 : vector<8x8xf32>
    %cst_9 = arith.constant dense<0.000000e+00> : vector<8xf32>
    %24 = vector.multi_reduction <add>, %21, %cst_9 [1] : vector<8x8xf32> to vector<8xf32>
    %25 = vector.shape_cast %24 : vector<8xf32> to vector<8x1xf32>
    %c0_10 = arith.constant 0 : index
    %c0_11 = arith.constant 0 : index
    %26 = vector.load %arg4[%c0_10, %c0_11] : memref<8x1xf32, #tpu.memory_space<vmem>>, vector<8x1xf32>
    tpu.vector_store %arg4[%c0_10, %c0_11], %25 {strides = array<i32>} : memref<8x1xf32, #tpu.memory_space<vmem>>, vector<8x1xf32>,
    %c0_12 = arith.constant 0 : index
    %c0_13 = arith.constant 0 : index
    %27 = vector.load %arg5[%c0_12, %c0_13] : memref<8x1xf32, #tpu.memory_space<vmem>>, vector<8x1xf32>
    tpu.vector_store %arg5[%c0_12, %c0_13], %18 {strides = array<i32>} : memref<8x1xf32, #tpu.memory_space<vmem>>, vector<8x1xf32>,
    %c0_14 = arith.constant 0 : index
    %c0_15 = arith.constant 0 : index
    %28 = vector.load %arg6[%c0_14, %c0_15] : memref<8x1xf32, #tpu.memory_space<vmem>>, vector<8x1xf32>
    tpu.vector_store %arg6[%c0_14, %c0_15], %15 {strides = array<i32>} : memref<8x1xf32, #tpu.memory_space<vmem>>, vector<8x1xf32>,
    %cst_16 = arith.constant dense<0.000000e+00> : vector<8xf32>
    %29 = vector.multi_reduction <add>, %21, %cst_16 [0] : vector<8x8xf32> to vector<8xf32>
    %30 = vector.shape_cast %29 : vector<8xf32> to vector<1x8xf32>
    %31 = vector.shape_cast %30 : vector<1x8xf32> to vector<1x1x8xf32>
    %c0_17 = arith.constant 0 : index
    %c0_18 = arith.constant 0 : index
    %c0_19 = arith.constant 0 : index
    %32 = vector.load %arg7[%c0_17, %c0_18, %c0_19] : memref<1x1x8xf32, #tpu.memory_space<vmem>>, vector<1x1x8xf32>
    tpu.vector_store %arg7[%c0_17, %c0_18, %c0_19], %31 {strides = array<i32>} : memref<1x1x8xf32, #tpu.memory_space<vmem>>, vector<1x1x8xf32>,
    %cst_20 = arith.constant 0.000000e+00 : f32
    %33 = vector.broadcast %cst_20 : f32 to vector<8x8xf32>
    %34 = arith.select %11, %33, %23 : vector<8x8xi1>, vector<8x8xf32>
    %cst_21 = arith.constant dense<0.000000e+00> : vector<8xf32>
    %35 = vector.multi_reduction <add>, %34, %cst_21 [0] : vector<8x8xf32> to vector<8xf32>
    %36 = vector.shape_cast %35 : vector<8xf32> to vector<1x8xf32>
    %37 = vector.shape_cast %36 : vector<1x8xf32> to vector<1x1x8xf32>
    %c0_22 = arith.constant 0 : index
    %c0_23 = arith.constant 0 : index
    %c0_24 = arith.constant 0 : index
    %38 = vector.load %arg8[%c0_22, %c0_23, %c0_24] : memref<1x1x8xf32, #tpu.memory_space<vmem>>, vector<1x1x8xf32>
    tpu.vector_store %arg8[%c0_22, %c0_23, %c0_24], %37 {strides = array<i32>} : memref<1x1x8xf32, #tpu.memory_space<vmem>>, vector<1x1x8xf32>,
    return
  }
  func.func @transform_0(%arg0: i32) -> (i32, i32) {
    %c0_i32 = arith.constant 0 : i32
    %c0_i32_0 = arith.constant 0 : i32
    %c0_i32_1 = arith.constant 0 : i32
    return %c0_i32, %c0_i32_0 : i32, i32
  }
  func.func @transform_1(%arg0: i32) -> (i32, i32) {
    %c0_i32 = arith.constant 0 : i32
    %c0_i32_0 = arith.constant 0 : i32
    return %arg0, %c0_i32 : i32, i32
  }
  func.func @transform_2(%arg0: i32) -> (i32, i32) {
    %c0_i32 = arith.constant 0 : i32
    %c0_i32_0 = arith.constant 0 : i32
    %c0_i32_1 = arith.constant 0 : i32
    return %c0_i32, %c0_i32_0 : i32, i32
  }
  func.func @transform_3(%arg0: i32) -> (i32, i32) {
    %c0_i32 = arith.constant 0 : i32
    %c0_i32_0 = arith.constant 0 : i32
    return %arg0, %c0_i32 : i32, i32
  }
  func.func @transform_4(%arg0: i32) -> (i32, i32) {
    %c0_i32 = arith.constant 0 : i32
    %c0_i32_0 = arith.constant 0 : i32
    return %arg0, %c0_i32 : i32, i32
  }
  func.func @transform_5(%arg0: i32) -> (i32, i32) {
    %c0_i32 = arith.constant 0 : i32
    %c0_i32_0 = arith.constant 0 : i32
    return %arg0, %c0_i32 : i32, i32
  }
  func.func @transform_6(%arg0: i32) -> (i32, i32, i32) {
    %c0_i32 = arith.constant 0 : i32
    %c0_i32_0 = arith.constant 0 : i32
    %c0_i32_1 = arith.constant 0 : i32
    return %arg0, %c0_i32, %c0_i32_0 : i32, i32, i32
  }
  func.func @transform_7(%arg0: i32) -> (i32, i32, i32) {
    %c0_i32 = arith.constant 0 : i32
    %c0_i32_0 = arith.constant 0 : i32
    %c0_i32_1 = arith.constant 0 : i32
    return %arg0, %c0_i32, %c0_i32_0 : i32, i32, i32
  }
}

</mosaic_0001>

<llo_original>
// kernel: tpu_custom_call.1
$region0: #{tpu_custom_call.1}
  #allocation0 [shape = 'u32[]', space=smem, size = 0x4, offset = 0x4, fixed_abs, tag = 'smem constant byte address 0x4 - core index']
  #allocation1 [shape = 'u32[144,128]{1,0:T(1,128)}', space=vmem, size = 0x12000, scoped, tag = 'internal scratch']
  #allocation2 [shape = 'f32[1,1]{1,0:T(1,128)S(6)}', space=smem, size = 0x200, scoped, tag = 'scoped memory for tpu_custom_call.1']
  %s0 = inlined_call_operand.<no memory space> [shape: f32[1,1], index: 0, kind: input, shape index: {}]
  %s1 = inlined_call_operand.hbm [shape: f32[8,128], index: 1, kind: input, shape index: {}]
  %s2 = inlined_call_operand.hbm [shape: f32[8,128], index: 2, kind: input, shape index: {}]
  %s3 = inlined_call_operand.vmem [shape: f32[8,1], index: 3, kind: output, shape index: {0}]
  %s4 = inlined_call_operand.vmem [shape: f32[8,1], index: 4, kind: output, shape index: {1}]
  %s5 = inlined_call_operand.vmem [shape: f32[8,1], index: 5, kind: output, shape index: {2}]
  %s6 = inlined_call_operand.hbm [shape: f32[1,1,8], index: 6, kind: output, shape index: {3}]
  %s7 = inlined_call_operand.hbm [shape: f32[1,1,8], index: 7, kind: output, shape index: {4}]
  %8 = xla_tuple %s3, %s4, %s5, %s6, %s7
  %s9 = sld [smem:[#allocation0]]
  $region62: #{tpu_custom_call.1} parent=0
    _
  %s11 = ssub.s32 1, %s9
  %s12 = scalar_select 0, %s11, %s9
  %13 = sst [smem:[#allocation2]] %s0
  $region1: #{tpu_custom_call.1} parent=0
    #allocation3 [shape = 'u8[4096]{0}', space=vmem, size = 0x1000, scoped, tag = 'input window, operand 1, single buffered']
    #allocation4 [shape = 's32[1]{0}', space=sflag, size = 0x4, scoped, tag = 'scoped memory for tpu_custom_call.1']
    #allocation5 [shape = 's32[1]{0}', space=sflag, size = 0x4, scoped, tag = 'scoped memory for tpu_custom_call.1']
    #allocation6 [shape = 'u8[4096]{0}', space=vmem, size = 0x1000, scoped, tag = 'input window, operand 2, single buffered']
    #allocation7 [shape = 's32[1]{0}', space=sflag, size = 0x4, scoped, tag = 'scoped memory for tpu_custom_call.1']
    #allocation8 [shape = 'u8[512]{0}', space=vmem, size = 0x400, scoped, tag = 'output window, operand 3, single buffered']
    #allocation9 [shape = 'u8[512]{0}', space=vmem, size = 0x400, scoped, tag = 'output window, operand 4, single buffered']
    #allocation10 [shape = 's32[1]{0}', space=sflag, size = 0x4, scoped, tag = 'scoped memory for tpu_custom_call.1']
    %14 = vsyncpa [#allocation4], 0
    %15 = vsyncpa [#allocation7], 0
    %16 = vsyncpa [#allocation5], 0
    %17 = vsyncpa [#allocation10], 0
    // Predicated region
    $region2: #{tpu_custom_call.1} parent=1 // pred_check
      _
    $region3: #{tpu_custom_call.1} parent=1 // pred_check_branch
      %19 = sbr.rel (0) target = $region5
    $region4: #{tpu_custom_call.1} parent=1 // pred_region
      _
    $region5: #{tpu_custom_call.1} parent=1 // pred_fallthru
      _
    // Predicated region
    $region6: #{tpu_custom_call.1} parent=1 // pred_check
      _
    $region7: #{tpu_custom_call.1} parent=1 // pred_check_branch
      %21 = sbr.rel (0) target = $region9
    $region8: #{tpu_custom_call.1} parent=1 // pred_region
      %s23 = ssub.s32 128, 128
      %24 = vsyncadd [#allocation4], %s23
      %s26 = sshll.u32 [#allocation3], 4
      %s27 = int_to_ptr.vmem [resolvable:$true] %s26
      %29 = dma.hbm_to_vmem [thread:$0]  %s1, 128, %s27, [#allocation4]
    $region9: #{tpu_custom_call.1} parent=1 // pred_fallthru
      _
    // Predicated region
    $region10: #{tpu_custom_call.1} parent=1 // pred_check
      _
    $region11: #{tpu_custom_call.1} parent=1 // pred_check_branch
      %31 = sbr.rel (0) target = $region13
    $region12: #{tpu_custom_call.1} parent=1 // pred_region
      %s33 = ssub.s32 128, 128
      %34 = vsyncadd [#allocation7], %s33
      %s36 = sshll.u32 [#allocation6], 4
      %s37 = int_to_ptr.vmem [resolvable:$true] %s36
      %39 = dma.hbm_to_vmem [thread:$0]  %s2, 128, %s37, [#allocation7]
    $region13: #{tpu_custom_call.1} parent=1 // pred_fallthru
      _
    // Predicated region
    $region14: #{tpu_custom_call.1} parent=1 // pred_check
      _
    $region15: #{tpu_custom_call.1} parent=1 // pred_check_branch
      %41 = sbr.rel (0) target = $region17
    $region16: #{tpu_custom_call.1} parent=1 // pred_region
      %42 = dma.done [#allocation4], 128
    $region17: #{tpu_custom_call.1} parent=1 // pred_fallthru
      _
    // Predicated region
    $region18: #{tpu_custom_call.1} parent=1 // pred_check
      _
    $region19: #{tpu_custom_call.1} parent=1 // pred_check_branch
      %44 = sbr.rel (0) target = $region21
    $region20: #{tpu_custom_call.1} parent=1 // pred_region
      %45 = dma.done [#allocation7], 128
    $region21: #{tpu_custom_call.1} parent=1 // pred_fallthru
      _
    %s46 = smul.u32 0, 8
    %s47 = sld [smem:[#allocation2]]
    %v48 = vld [vmem:[#allocation3] sm:$0xff]
    %v49 = vld [vmem:[#allocation6] sm:$0xff]
    %50 = vmatprep.subr.mxu0 0.0
    %51 = vmatpush1.xpose.msra.mxu0 %v49
    %52 = vmatprep.subr.mxu0 0.0
    %53 = vmatpush1.xpose.msra.mxu0 0.0
    %54 = vmatprep.subr.mxu0 0.0
    %55 = vmatpush1.xpose.msra.mxu0 0.0
    %56 = vmatprep.subr.mxu0 0.0
    %57 = vmatpush1.xpose.msra.mxu0 0.0
    %58 = vmatprep.subr.mxu0 0.0
    %59 = vmatpush1.xpose.msra.mxu0 0.0
    %60 = vmatprep.subr.mxu0 0.0
    %61 = vmatpush1.xpose.msra.mxu0 0.0
    %62 = vmatprep.subr.mxu0 0.0
    %63 = vmatpush1.xpose.msra.mxu0 0.0
    %64 = vmatprep.subr.mxu0 0.0
    %65 = vmatpush1.xpose.msra.mxu0 0.0
    %66 = vmatprep.subr.mxu0 0.0
    %67 = vmatpush1.xpose.msra.mxu0 0.0
    %68 = vmatprep.subr.mxu0 0.0
    %69 = vmatpush1.xpose.msra.mxu0 0.0
    %70 = vmatprep.subr.mxu0 0.0
    %71 = vmatpush1.xpose.msra.mxu0 0.0
    %72 = vmatprep.subr.mxu0 0.0
    %73 = vmatpush1.xpose.msra.mxu0 0.0
    %74 = vmatprep.subr.mxu0 0.0
    %75 = vmatpush1.xpose.msra.mxu0 0.0
    %76 = vmatprep.subr.mxu0 0.0
    %77 = vmatpush1.xpose.msra.mxu0 0.0
    %78 = vmatprep.subr.mxu0 0.0
    %79 = vmatpush1.xpose.msra.mxu0 0.0
    %80 = vmatprep.subr.mxu0 0.0
    %81 = vmatpush1.xpose.msra.mxu0 0.0
    %82 = vmatprep.subr.mxu0 0.0
    %83 = vmatpush1.xpose.msra.mxu0 0.0
    %84 = vmatprep.subr.mxu0 0.0
    %85 = vmatpush1.xpose.msra.mxu0 0.0
    %86 = vmatprep.subr.mxu0 0.0
    %87 = vmatpush1.xpose.msra.mxu0 0.0
    %88 = vmatprep.subr.mxu0 0.0
    %89 = vmatpush1.xpose.msra.mxu0 0.0
    %90 = vmatprep.subr.mxu0 0.0
    %91 = vmatpush1.xpose.msra.mxu0 0.0
    %92 = vmatprep.subr.mxu0 0.0
    %93 = vmatpush1.xpose.msra.mxu0 0.0
    %94 = vmatprep.subr.mxu0 0.0
    %95 = vmatpush1.xpose.msra.mxu0 0.0
    %96 = vmatprep.subr.mxu0 0.0
    %97 = vmatpush1.xpose.msra.mxu0 0.0
    %98 = vmatprep.subr.mxu0 0.0
    %99 = vmatpush1.xpose.msra.mxu0 0.0
    %100 = vmatprep.subr.mxu0 0.0
    %101 = vmatpush1.xpose.msra.mxu0 0.0
    %102 = vmatprep.subr.mxu0 0.0
    %103 = vmatpush1.xpose.msra.mxu0 0.0
    %104 = vmatprep.subr.mxu0 0.0
    %105 = vmatpush1.xpose.msra.mxu0 0.0
    %106 = vmatprep.subr.mxu0 0.0
    %107 = vmatpush1.xpose.msra.mxu0 0.0
    %108 = vmatprep.subr.mxu0 0.0
    %109 = vmatpush1.xpose.msra.mxu0 0.0
    %110 = vmatprep.subr.mxu0 0.0
    %111 = vmatpush1.xpose.msra.mxu0 0.0
    %112 = vmatprep.subr.mxu0 0.0
    %113 = vmatpush1.xpose.msra.mxu0 0.0
    %114 = vmatprep.mubr.f32.mxu0 0.0
    %115 = vmatmul.mubr.f32.gmra.mrb[0].mxu0 %v48
    %v116 = vpop.f32.mrb[0].mxu0
    %v117 = vadd.f32 0.0, %v116
    %v118 = vpop.f32.mrb[0].mxu0
    %119 = vdwg.mxu0
    %v120 = vstv %s47
    %v121 = vmul.f32 %v117, %v120
    %v122 = vlaneseq
    %v123 = vand.u32 %v122, 127
    %v124 = vlaneseq
    %v125 = vshrl.u32 %v124, 7
    %v126 = vstv %s46
    %v127 = vadd.s32 %v125, %v126
    %vm128 = vcmp.eq.s32.totalorder %v123, %v127
    %v129 = vsel %vm128, %v121, 0.0
    %vm130 = vcmask 64512
    %v131 = vsel %vm130, %v129, 0.0
    %132 = vadd.xlane.f32.xlu0 %v131
    %v133 = vpop.xlane.xlu0 %132
    %v134 = vmul.f32 %v133, 0.5
    %v135 = vmul.f32 %v134, 1.442695
    %v136 = vpow.pop %v135
    %v137 = vmul.f32 %v121, 0.5
    %v138 = vmul.f32 %v137, 1.442695
    %v139 = vpow.pop %v138
    %v140 = vmul.f32 %v139, %v139
    %v141 = vmul.f32 %v140, %v139
    %v142 = vsel %vm130, %v139, 0.0
    %143 = vadd.xlane.f32.xlu0 %v142
    %v144 = vpop.xlane.xlu0 %143
    %vm145 = vcmask 7168
    %146 = vst.msk [vmem:[%s3] sm:$0xff] %vm145, %v144
    %147 = vst.msk [vmem:[%s4] sm:$0xff] %vm145, %v136
    %148 = vst.msk [vmem:[%s5] sm:$0xff] %vm145, %v133
    %v149 = vrot.slane %v142, 4
    %v150 = vadd.f32 %v142, %v149
    %v151 = vrot.slane %v150, 2
    %v152 = vadd.f32 %v150, %v151
    %v153 = vrot.slane %v152, 1
    %v154 = vadd.f32 %v152, %v153
    %vm155 = vcmask 57344
    %156 = vst.msk [vmem:[#allocation8] sm:$0x1] %vm155, %v154
    %v157 = vsel %vm128, 0.0, %v141
    %v158 = vsel %vm130, %v157, 0.0
    %v159 = vrot.slane %v158, 4
    %v160 = vadd.f32 %v158, %v159
    %v161 = vrot.slane %v160, 2
    %v162 = vadd.f32 %v160, %v161
    %v163 = vrot.slane %v162, 1
    %v164 = vadd.f32 %v162, %v163
    %165 = vst.msk [vmem:[#allocation9] sm:$0x1] %vm155, %v164
    // Predicated region
    $region22: #{tpu_custom_call.1} parent=1 // pred_check
      _
    $region23: #{tpu_custom_call.1} parent=1 // pred_check_branch
      %167 = sbr.rel (0) target = $region25
    $region24: #{tpu_custom_call.1} parent=1 // pred_region
      _
    $region25: #{tpu_custom_call.1} parent=1 // pred_fallthru
      _
    // Predicated region
    $region26: #{tpu_custom_call.1} parent=1 // pred_check
      _
    $region27: #{tpu_custom_call.1} parent=1 // pred_check_branch
      %169 = sbr.rel (0) target = $region29
    $region28: #{tpu_custom_call.1} parent=1 // pred_region
      _
    $region29: #{tpu_custom_call.1} parent=1 // pred_fallthru
      _
    // Predicated region
    $region30: #{tpu_custom_call.1} parent=1 // pred_check
      _
    $region31: #{tpu_custom_call.1} parent=1 // pred_check_branch
      %171 = sbr.rel (0) target = $region33
    $region32: #{tpu_custom_call.1} parent=1 // pred_region
      _
    $region33: #{tpu_custom_call.1} parent=1 // pred_fallthru
      _
    // Predicated region
    $region34: #{tpu_custom_call.1} parent=1 // pred_check
      _
    $region35: #{tpu_custom_call.1} parent=1 // pred_check_branch
      %173 = sbr.rel (0) target = $region37
    $region36: #{tpu_custom_call.1} parent=1 // pred_region
      %s175 = ssub.s32 16, 16
      %176 = vsyncadd [#allocation5], %s175
      %s178 = sshll.u32 [#allocation8], 4
      %s179 = int_to_ptr.vmem [resolvable:$true] %s178
      %181 = dma.vmem_to_hbm [thread:$0]  %s179, 16, %s6, [#allocation5]
    $region37: #{tpu_custom_call.1} parent=1 // pred_fallthru
      _
    // Predicated region
    $region38: #{tpu_custom_call.1} parent=1 // pred_check
      _
    $region39: #{tpu_custom_call.1} parent=1 // pred_check_branch
      %183 = sbr.rel (0) target = $region41
    $region40: #{tpu_custom_call.1} parent=1 // pred_region
      %s185 = ssub.s32 16, 16
      %186 = vsyncadd [#allocation10], %s185
      %s188 = sshll.u32 [#allocation9], 4
      %s189 = int_to_ptr.vmem [resolvable:$true] %s188
      %191 = dma.vmem_to_hbm [thread:$0]  %s189, 16, %s7, [#allocation10]
    $region41: #{tpu_custom_call.1} parent=1 // pred_fallthru
      _
    // Predicated region
    $region42: #{tpu_custom_call.1} parent=1 // pred_check
      _
    $region43: #{tpu_custom_call.1} parent=1 // pred_check_branch
      %193 = sbr.rel (0) target = $region45
    $region44: #{tpu_custom_call.1} parent=1 // pred_region
      _
    $region45: #{tpu_custom_call.1} parent=1 // pred_fallthru
      _
    // Predicated region
    $region46: #{tpu_custom_call.1} parent=1 // pred_check
      _
    $region47: #{tpu_custom_call.1} parent=1 // pred_check_branch
      %195 = sbr.rel (0) target = $region49
    $region48: #{tpu_custom_call.1} parent=1 // pred_region
      _
    $region49: #{tpu_custom_call.1} parent=1 // pred_fallthru
      _
    // Predicated region
    $region50: #{tpu_custom_call.1} parent=1 // pred_check
      _
    $region51: #{tpu_custom_call.1} parent=1 // pred_check_branch
      %197 = sbr.rel (0) target = $region53
    $region52: #{tpu_custom_call.1} parent=1 // pred_region
      _
    $region53: #{tpu_custom_call.1} parent=1 // pred_fallthru
      _
    // Predicated region
    $region54: #{tpu_custom_call.1} parent=1 // pred_check
      _
    $region55: #{tpu_custom_call.1} parent=1 // pred_check_branch
      %199 = sbr.rel (0) target = $region57
    $region56: #{tpu_custom_call.1} parent=1 // pred_region
      %200 = dma.done [#allocation5], 16
    $region57: #{tpu_custom_call.1} parent=1 // pred_fallthru
      _
    // Predicated region
    $region58: #{tpu_custom_call.1} parent=1 // pred_check
      _
    $region59: #{tpu_custom_call.1} parent=1 // pred_check_branch
      %202 = sbr.rel (0) target = $region61
    $region60: #{tpu_custom_call.1} parent=1 // pred_region
      %203 = dma.done [#allocation10], 16
    $region61: #{tpu_custom_call.1} parent=1 // pred_fallthru
      _
    %204 = vsyncpa [#allocation4], 1
    %205 = vsyncpa [#allocation7], 1
    %206 = vsyncpa [#allocation5], 1
    %207 = vsyncpa [#allocation10], 1

</llo_original>
